<compile_context>
chip_gen: v7x
topology: tpu7x:2x2x1
jax: 0.10.0
libtpu: 0.0.40
codegen_flags: <defaults>
</compile_context>

<pallas_src>
import functools

import jax
import jax.numpy as jnp
from jax.experimental import pallas as pl
from jax.experimental.pallas import tpu as pltpu

_LANE = 128             # vreg lane width
_SUB = 8                # sublane count
_MAX_BLOCK_ROWS = 4096  # (4096, 128) f32 tile = 2 MiB per stream per buffer


@functools.lru_cache(maxsize=1)
def _vmem_limit_bytes():
    # Generation-aware scoped-VMEM limit: headroom on 128 MiB parts (v5e/v6e),
    # conservative on v7x's 64 MiB physical VMEM.  Worst-case footprint here is
    # ~16 MiB (4 f32 streams, double-buffered, 4096-row blocks).
    try:
        cap = int(pltpu.get_tpu_info().vmem_capacity_bytes)
        return int(min(cap // 2, 64 * 1024 * 1024))
    except Exception:
        return 32 * 1024 * 1024


def _elem_loss_f32(p, t, w, eps):
    """Elementwise sqrt((p-t)^2 + eps) [* w] in f32 (used for jnp tail path)."""
    d = p.astype(jnp.float32) - t.astype(jnp.float32)
    v = jnp.sqrt(d * d + eps)
    if w is not None:
        v = v * w.astype(jnp.float32)
    return v


def _make_elem_kernel(eps, has_weight, scale):
    """Elementwise loss_weight * sqrt((p-t)^2 + eps) [* w], reduction='none'."""
    def kernel(*refs):
        if has_weight:
            p_ref, t_ref, w_ref, o_ref = refs
        else:
            p_ref, t_ref, o_ref = refs
        d = p_ref[...].astype(jnp.float32) - t_ref[...].astype(jnp.float32)
        v = jnp.sqrt(d * d + eps)
        if has_weight:
            v = v * w_ref[...].astype(jnp.float32)
        if scale != 1.0:
            v = v * scale
        o_ref[...] = v.astype(o_ref.dtype)
    return kernel


def _make_sum_kernel(eps, has_weight, want_wsum, block_rows, chunk,
                     n_blocks, last_rows, has_overshoot):
    """Per-chunk partial sums over a (n_chunks, chunk) grid.

    Accumulates into an (8,128) f32 scratch via a per-step sublane collapse.
    Only the (possibly) ragged last block pays the row mask; an overshoot
    block (odd n_blocks with 2 chunks) is skipped entirely.
    When want_wsum, also accumulates the weight sum (masked_loss weighted mean).
    """
    ragged = (last_rows != block_rows)

    def kernel(*refs):
        idx = 0
        p_ref = refs[idx]; idx += 1
        t_ref = refs[idx]; idx += 1
        w_ref = None
        if has_weight:
            w_ref = refs[idx]; idx += 1
        o_ref = refs[idx]; idx += 1
        ow_ref = None
        if want_wsum:
            ow_ref = refs[idx]; idx += 1
        acc_ref = refs[idx]; idx += 1
        accw_ref = refs[idx] if want_wsum else None

        i = pl.program_id(1)

        @pl.when(i == 0)
        def _init():
            acc_ref[...] = jnp.zeros_like(acc_ref)
            if want_wsum:
                accw_ref[...] = jnp.zeros_like(accw_ref)

        d = p_ref[...].astype(jnp.float32) - t_ref[...].astype(jnp.float32)
        v = jnp.sqrt(d * d + eps)
        w = None
        if has_weight:
            w = w_ref[...].astype(jnp.float32)
            v = v * w

        def collapse(x):
            # (block_rows,128) -> (8,128): layout-aligned reshape, pure VPU adds.
            return jnp.sum(x.reshape(block_rows // _SUB, _SUB, _LANE), axis=0)

        def accumulate(loss_v, wt_v):
            acc_ref[...] += collapse(loss_v)
            if want_wsum:
                accw_ref[...] += collapse(wt_v)

        if not ragged and not has_overshoot:
            # Hot path: every block is full and valid -> no masking at all.
            accumulate(v, w)
        else:
            blk = pl.program_id(0) * chunk + i
            full_cond = blk < n_blocks
            if ragged:
                full_cond = jnp.logical_and(full_cond, blk != n_blocks - 1)

            @pl.when(full_cond)
            def _full():
                accumulate(v, w)

            if ragged:
                @pl.when(blk == n_blocks - 1)
                def _last():
                    r = jax.lax.broadcasted_iota(
                        jnp.int32, (block_rows, _LANE), 0)
                    keep = r < last_rows
                    accumulate(jnp.where(keep, v, 0.0),
                               jnp.where(keep, w, 0.0) if want_wsum else None)

        @pl.when(i == pl.num_programs(1) - 1)
        def _fin():
            o_ref[...] = acc_ref[...]
            if want_wsum:
                ow_ref[...] = accw_ref[...]

    return kernel


def charbonnier_loss_pallas(pred, target, weight=None, *, loss_weight=1.0,
                            reduction='mean', eps=1e-12,
                            max_block_rows=_MAX_BLOCK_ROWS):
    """JAX/Pallas equivalent of mmsr CharbonnierLoss.forward.

    loss = sqrt((pred - target)^2 + eps) [* weight], reduced
    ('none' | 'mean' | 'sum'), scaled by loss_weight.  Weighted 'mean' divides
    by (weight.sum() + 1e-12) per the masked_loss decorator (sample_wise=False).
    """
    if reduction not in ('none', 'mean', 'sum'):
        raise ValueError(f'Unsupported reduction mode: {reduction}.')
    assert pred.shape == target.shape
    # TODO(synk): broadcastable (N,1,H,W) weights and sample_wise=True are not
    # supported; weight must match pred's shape exactly.
    orig_shape = pred.shape
    n_elem = int(pred.size)
    eps = float(eps)
    loss_weight = float(loss_weight)

    has_weight = weight is not None
    if has_weight:
        assert weight.shape == orig_shape
        out_dtype = jnp.result_type(pred.dtype, target.dtype, weight.dtype)
    else:
        out_dtype = jnp.result_type(pred.dtype, target.dtype)

    vmem_limit = _vmem_limit_bytes()

    pred_f = pred.reshape(-1)
    target_f = target.reshape(-1)
    weight_f = weight.reshape(-1) if has_weight else None

    # Aligned prefix processed by the kernel; <1024-element ragged tail via jnp
    # (no jnp.pad of the inputs, no post-kernel slice of the output).
    n_main = (n_elem // (_LANE * _SUB)) * (_LANE * _SUB)
    n_tail = n_elem - n_main

    if n_main == 0:
        # Tiny input: nothing worth a kernel launch; pure jnp fallback.
        v = _elem_loss_f32(pred_f, target_f, weight_f, eps)
        if reduction == 'none':
            return (loss_weight * v).astype(out_dtype).reshape(orig_shape)
        total = jnp.sum(v)
        if reduction == 'mean':
            if has_weight:
                total = total / (jnp.sum(weight_f.astype(jnp.float32)) + 1e-12)
            else:
                total = total / jnp.float32(n_elem)
        return (loss_weight * total).astype(out_dtype)

    def main_slab(x):
        xm = x if n_tail == 0 else x[:n_main]
        return xm.reshape(-1, _LANE)

    tails = None
    if n_tail:
        tails = (pred_f[n_main:], target_f[n_main:],
                 weight_f[n_main:] if has_weight else None)

    inputs = [main_slab(pred_f), main_slab(target_f)]
    if has_weight:
        inputs.append(main_slab(weight_f))
    n_in = len(inputs)

    rows = n_main // _LANE                        # multiple of 8
    max_block_rows = max(_SUB, (int(max_block_rows) // _SUB) * _SUB)
    block_rows = min(rows, max_block_rows)        # multiple of 8
    n_blocks = pl.cdiv(rows, block_rows)

    if reduction == 'none':
        out_main = pl.pallas_call(
            _make_elem_kernel(eps, has_weight, loss_weight),
            out_shape=jax.ShapeDtypeStruct((rows, _LANE), out_dtype),
            grid=(n_blocks,),
            in_specs=[pl.BlockSpec((block_rows, _LANE),
                                   lambda i: (i, 0))] * n_in,
            out_specs=pl.BlockSpec((block_rows, _LANE), lambda i: (i, 0)),
            compiler_params=pltpu.CompilerParams(
                dimension_semantics=("parallel",),
                vmem_limit_bytes=vmem_limit),
        )(*inputs)
        out_flat = out_main.reshape(-1)
        if n_tail:
            tail_v = (loss_weight *
                      _elem_loss_f32(tails[0], tails[1], tails[2], eps)
                      ).astype(out_dtype)
            out_flat = jnp.concatenate([out_flat, tail_v])
        return out_flat.reshape(orig_shape)

    # ---- 'mean' / 'sum': in-kernel accumulation, per-chunk partial sums. ----
    want_wsum = has_weight and reduction == 'mean'

    n_chunks = 2 if n_blocks >= 2 else 1          # always 2-way when possible
    chunk = pl.cdiv(n_blocks, n_chunks)
    has_overshoot = n_chunks * chunk > n_blocks
    last_rows = rows - (n_blocks - 1) * block_rows

    if has_overshoot:
        def in_map(c, i):
            return (jnp.minimum(c * chunk + i, n_blocks - 1), 0)
    else:
        def in_map(c, i):
            return (c * chunk + i, 0)

    kernel = _make_sum_kernel(eps, has_weight, want_wsum, block_rows, chunk,
                              n_blocks, last_rows, has_overshoot)

    part_shape = jax.ShapeDtypeStruct((n_chunks * _SUB, _LANE), jnp.float32)
    out_spec = pl.BlockSpec((_SUB, _LANE), lambda c, i: (c, 0))
    if want_wsum:
        out_shape = (part_shape, part_shape)
        out_specs = (out_spec, out_spec)
        scratch = [pltpu.VMEM((_SUB, _LANE), jnp.float32),
                   pltpu.VMEM((_SUB, _LANE), jnp.float32)]
    else:
        out_shape = part_shape
        out_specs = out_spec
        scratch = [pltpu.VMEM((_SUB, _LANE), jnp.float32)]

    outs = pl.pallas_call(
        kernel,
        out_shape=out_shape,
        grid=(n_chunks, chunk),
        in_specs=[pl.BlockSpec((block_rows, _LANE), in_map)] * n_in,
        out_specs=out_specs,
        scratch_shapes=scratch,
        compiler_params=pltpu.CompilerParams(
            dimension_semantics=("parallel", "arbitrary"),
            vmem_limit_bytes=vmem_limit),
    )(*inputs)

    if want_wsum:
        part_loss, part_w = outs
        wsum = jnp.sum(part_w)
    else:
        part_loss = outs
        wsum = None

    total = jnp.sum(part_loss)
    if n_tail:
        total = total + jnp.sum(_elem_loss_f32(tails[0], tails[1], tails[2], eps))
        if want_wsum:
            wsum = wsum + jnp.sum(tails[2].astype(jnp.float32))

    if reduction == 'mean':
        if want_wsum:
            total = total / (wsum + 1e-12)
        else:
            total = total / jnp.float32(n_elem)
    return (loss_weight * total).astype(out_dtype)


if __name__ == "__main__":
    key = jax.random.PRNGKey(0)
    k1, k2, k3 = jax.random.split(key, 3)
    shape = (2, 4, 16, 16)  # (N, C, H, W)
    pred = jax.random.normal(k1, shape, dtype=jnp.float32)
    target = jax.random.normal(k2, shape, dtype=jnp.float32)
    weight = jax.random.uniform(k3, shape, dtype=jnp.float32)

    eps = 1e-12
    elem_ref = jnp.sqrt((pred - target) ** 2 + eps)

    # Default CharbonnierLoss(): reduction='mean', weight=None.
    loss_mean = jax.block_until_ready(
        charbonnier_loss_pallas(pred, target, reduction='mean', eps=eps))
    assert jnp.allclose(loss_mean, jnp.mean(elem_ref), rtol=1e-5, atol=1e-6)

    loss_sum = jax.block_until_ready(
        charbonnier_loss_pallas(pred, target, reduction='sum', eps=eps))
    assert jnp.allclose(loss_sum, jnp.sum(elem_ref), rtol=1e-5, atol=1e-3)

    # 'none' with loss_weight folded into the kernel.
    loss_none = jax.block_until_ready(
        charbonnier_loss_pallas(pred, target, reduction='none',
                                loss_weight=0.5, eps=eps))
    assert loss_none.shape == shape and loss_none.dtype == pred.dtype
    assert jnp.allclose(loss_none, 0.5 * elem_ref, rtol=1e-5, atol=1e-6)

    # Weighted 'sum'.
    loss_wsum = jax.block_until_ready(
        charbonnier_loss_pallas(pred, target, weight, reduction='sum', eps=eps))
    assert jnp.allclose(loss_wsum, jnp.sum(elem_ref * weight),
                        rtol=1e-5, atol=1e-3)

    # Weighted 'mean' (masked_loss semantics: divide by weight sum).
    loss_wmean = jax.block_until_ready(
        charbonnier_loss_pallas(pred, target, weight, reduction='mean', eps=eps))
    ref_wmean = jnp.sum(elem_ref * weight) / (jnp.sum(weight) + 1e-12)
    assert jnp.allclose(loss_wmean, ref_wmean, rtol=1e-5, atol=1e-6)

    # Weighted 'none'.
    loss_wnone = jax.block_until_ready(
        charbonnier_loss_pallas(pred, target, weight, reduction='none', eps=eps))
    assert jnp.allclose(loss_wnone, elem_ref * weight, rtol=1e-5, atol=1e-6)

    # bf16 inputs: 'none' preserves the promoted dtype, native-dtype streams.
    pred_bf = pred.astype(jnp.bfloat16)
    target_bf = target.astype(jnp.bfloat16)
    loss_bf = jax.block_until_ready(
        charbonnier_loss_pallas(pred_bf, target_bf, reduction='none', eps=eps))
    ref_bf = jnp.sqrt(
        (pred_bf.astype(jnp.float32) - target_bf.astype(jnp.float32)) ** 2
        + eps)
    assert loss_bf.dtype == jnp.bfloat16
    assert jnp.allclose(loss_bf.astype(jnp.float32), ref_bf,
                        rtol=2e-2, atol=2e-2)

    # Ragged shape (5200 elems: 1024-aligned prefix + 80-elem jnp tail) with a
    # small block size to exercise the ragged last block, the 2-way chunk axis
    # and the clamped overshoot block.
    shape_r = (2, 2, 26, 50)
    kr1, kr2, kr3 = jax.random.split(jax.random.PRNGKey(1), 3)
    pred_r = jax.random.normal(kr1, shape_r, dtype=jnp.float32)
    target_r = jax.random.normal(kr2, shape_r, dtype=jnp.float32)
    weight_r = jax.random.uniform(kr3, shape_r, dtype=jnp.float32)
    elem_r = jnp.sqrt((pred_r - target_r) ** 2 + eps)

    lr_mean = jax.block_until_ready(
        charbonnier_loss_pallas(pred_r, target_r, reduction='mean', eps=eps,
                                max_block_rows=16))
    assert jnp.allclose(lr_mean, jnp.mean(elem_r), rtol=1e-5, atol=1e-6)

    lr_sum = jax.block_until_ready(
        charbonnier_loss_pallas(pred_r, target_r, reduction='sum', eps=eps,
                                max_block_rows=16))
    assert jnp.allclose(lr_sum, jnp.sum(elem_r), rtol=1e-5, atol=1e-3)

    lr_none = jax.block_until_ready(
        charbonnier_loss_pallas(pred_r, target_r, reduction='none', eps=eps,
                                max_block_rows=16))
    assert lr_none.shape == shape_r
    assert jnp.allclose(lr_none, elem_r, rtol=1e-5, atol=1e-6)

    lr_wmean = jax.block_until_ready(
        charbonnier_loss_pallas(pred_r, target_r, weight_r, reduction='mean',
                                eps=eps, max_block_rows=16))
    ref_r_wmean = jnp.sum(elem_r * weight_r) / (jnp.sum(weight_r) + 1e-12)
    assert jnp.allclose(lr_wmean, ref_r_wmean, rtol=1e-5, atol=1e-6)

    print("KERNEL_OK")
</pallas_src>

<mosaic_0001>
module attributes {stable_mosaic.version = 11 : i64} {
  func.func @kernel(%arg0: i32, %arg1: i32, %arg2: memref<16x128xf32, #tpu.memory_space<vmem>>, %arg3: memref<16x128xf32, #tpu.memory_space<vmem>>, %arg4: memref<8x128xf32, #tpu.memory_space<vmem>>, %arg5: memref<8x128xf32, #tpu.memory_space<vmem>>) attributes {dimension_semantics = [#tpu.dimension_semantics<parallel>, #tpu.dimension_semantics<arbitrary>], iteration_bounds = array<i64: 1, 1>, scalar_prefetch = 0 : i64, scratch_operands = 1 : i64, tpu.core_type = #tpu.core_type<tc>, window_params = [{transform_indices = @transform_0, window_bounds = array<i64: 16, 128>}, {transform_indices = @transform_1, window_bounds = array<i64: 16, 128>}, {transform_indices = @transform_2, window_bounds = array<i64: 8, 128>}]} {
    %c0_i32 = arith.constant 0 : i32
    %0 = arith.cmpi eq, %arg1, %c0_i32 : i32
    %1 = arith.extui %0 : i1 to i32
    %c0_i32_0 = arith.constant 0 : i32
    %2 = arith.cmpi ne, %1, %c0_i32_0 : i32
    scf.if %2 {
      %cst_11 = arith.constant 0.000000e+00 : f32
      %18 = vector.broadcast %cst_11 : f32 to vector<8x128xf32>
      %c0_12 = arith.constant 0 : index
      %c0_13 = arith.constant 0 : index
      %19 = vector.load %arg5[%c0_12, %c0_13] : memref<8x128xf32, #tpu.memory_space<vmem>>, vector<8x128xf32>
      tpu.vector_store %arg5[%c0_12, %c0_13], %18 {strides = array<i32>} : memref<8x128xf32, #tpu.memory_space<vmem>>, vector<8x128xf32>,
    } else {
    }
    %c0 = arith.constant 0 : index
    %c0_1 = arith.constant 0 : index
    %3 = vector.load %arg2[%c0, %c0_1] : memref<16x128xf32, #tpu.memory_space<vmem>>, vector<16x128xf32>
    %c0_2 = arith.constant 0 : index
    %c0_3 = arith.constant 0 : index
    %4 = vector.load %arg3[%c0_2, %c0_3] : memref<16x128xf32, #tpu.memory_space<vmem>>, vector<16x128xf32>
    %5 = arith.subf %3, %4 : vector<16x128xf32>
    %6 = arith.mulf %5, %5 : vector<16x128xf32>
    %cst = arith.constant 9.99999996E-13 : f32
    %7 = vector.broadcast %cst : f32 to vector<16x128xf32>
    %8 = arith.addf %6, %7 : vector<16x128xf32>
    %9 = math.sqrt %8 : vector<16x128xf32>
    %c0_4 = arith.constant 0 : index
    %c0_5 = arith.constant 0 : index
    %10 = vector.load %arg5[%c0_4, %c0_5] : memref<8x128xf32, #tpu.memory_space<vmem>>, vector<8x128xf32>
    %11 = vector.shape_cast %9 : vector<16x128xf32> to vector<2x8x128xf32>
    %cst_6 = arith.constant dense<0.000000e+00> : vector<8x128xf32>
    %12 = vector.multi_reduction <add>, %11, %cst_6 [0] : vector<2x8x128xf32> to vector<8x128xf32>
    %13 = arith.addf %10, %12 : vector<8x128xf32>
    %c0_7 = arith.constant 0 : index
    %c0_8 = arith.constant 0 : index
    %14 = vector.load %arg5[%c0_7, %c0_8] : memref<8x128xf32, #tpu.memory_space<vmem>>, vector<8x128xf32>
    tpu.vector_store %arg5[%c0_7, %c0_8], %13 {strides = array<i32>} : memref<8x128xf32, #tpu.memory_space<vmem>>, vector<8x128xf32>,
    %c0_i32_9 = arith.constant 0 : i32
    %15 = arith.cmpi eq, %arg1, %c0_i32_9 : i32
    %16 = arith.extui %15 : i1 to i32
    %c0_i32_10 = arith.constant 0 : i32
    %17 = arith.cmpi ne, %16, %c0_i32_10 : i32
    scf.if %17 {
      %c0_11 = arith.constant 0 : index
      %c0_12 = arith.constant 0 : index
      %18 = vector.load %arg5[%c0_11, %c0_12] : memref<8x128xf32, #tpu.memory_space<vmem>>, vector<8x128xf32>
      %c0_13 = arith.constant 0 : index
      %c0_14 = arith.constant 0 : index
      %19 = vector.load %arg4[%c0_13, %c0_14] : memref<8x128xf32, #tpu.memory_space<vmem>>, vector<8x128xf32>
      tpu.vector_store %arg4[%c0_13, %c0_14], %18 {strides = array<i32>} : memref<8x128xf32, #tpu.memory_space<vmem>>, vector<8x128xf32>,
    } else {
    }
    return
  }
  func.func @transform_0(%arg0: i32, %arg1: i32) -> (i32, i32) {
    %c1_i32 = arith.constant 1 : i32
    %0 = arith.muli %arg0, %c1_i32 : i32
    %1 = arith.addi %0, %arg1 : i32
    %c0_i32 = arith.constant 0 : i32
    %c0_i32_0 = arith.constant 0 : i32
    return %1, %c0_i32 : i32, i32
  }
  func.func @transform_1(%arg0: i32, %arg1: i32) -> (i32, i32) {
    %c1_i32 = arith.constant 1 : i32
    %0 = arith.muli %arg0, %c1_i32 : i32
    %1 = arith.addi %0, %arg1 : i32
    %c0_i32 = arith.constant 0 : i32
    %c0_i32_0 = arith.constant 0 : i32
    return %1, %c0_i32 : i32, i32
  }
  func.func @transform_2(%arg0: i32, %arg1: i32) -> (i32, i32) {
    %c0_i32 = arith.constant 0 : i32
    %c0_i32_0 = arith.constant 0 : i32
    return %arg0, %c0_i32 : i32, i32
  }
}

</mosaic_0001>

<llo_original>
// kernel: tpu_custom_call.1
$region0: #{tpu_custom_call.1}
  #allocation0 [shape = 'u32[]', space=smem, size = 0x4, offset = 0x4, fixed_abs, tag = 'smem constant byte address 0x4 - core index']
  #allocation1 [shape = 'u32[144,128]{1,0:T(1,128)}', space=vmem, size = 0x12000, scoped, tag = 'internal scratch']
  #allocation2 [shape = 'f32[8,128]{1,0:T(8,128)}', space=vmem, size = 0x1000, scoped, tag = 'scratch operand']
  %s0 = inlined_call_operand.hbm [shape: f32[16,128], index: 0, kind: input, shape index: {}]
  %s1 = inlined_call_operand.hbm [shape: f32[16,128], index: 1, kind: input, shape index: {}]
  %s2 = inlined_call_operand.hbm [shape: f32[8,128], index: 2, kind: output, shape index: {}]
  %s3 = sld [smem:[#allocation0]]
  $region34: #{tpu_custom_call.1} parent=0
    _
  %s5 = ssub.s32 1, %s3
  %s6 = scalar_select 0, %s5, %s3
  $region1: #{tpu_custom_call.1} parent=0
    #allocation3 [shape = 'u8[8192]{0}', space=vmem, size = 0x2000, scoped, tag = 'input window, operand 0, single buffered']
    #allocation4 [shape = 's32[1]{0}', space=sflag, size = 0x4, scoped, tag = 'scoped memory for tpu_custom_call.1']
    #allocation5 [shape = 's32[1]{0}', space=sflag, size = 0x4, scoped, tag = 'scoped memory for tpu_custom_call.1']
    #allocation6 [shape = 'u8[8192]{0}', space=vmem, size = 0x2000, scoped, tag = 'input window, operand 1, single buffered']
    #allocation7 [shape = 's32[1]{0}', space=sflag, size = 0x4, scoped, tag = 'scoped memory for tpu_custom_call.1']
    #allocation8 [shape = 'u8[4096]{0}', space=vmem, size = 0x1000, scoped, tag = 'output window, operand 0, single buffered']
    %7 = vsyncpa [#allocation4], 0
    %8 = vsyncpa [#allocation7], 0
    %9 = vsyncpa [#allocation5], 0
    // Predicated region
    $region2: #{tpu_custom_call.1} parent=1 // pred_check
      _
    $region3: #{tpu_custom_call.1} parent=1 // pred_check_branch
      %11 = sbr.rel (0) target = $region5
    $region4: #{tpu_custom_call.1} parent=1 // pred_region
      %s12 = sadd.s32 0, 0
      %s13 = smul.u32 2, %s12
      %s15 = ssub.s32 256, 256
      %16 = vsyncadd [#allocation4], %s15
      %s17 = smul.addr %s13, 128
      %s18 = scalar_lea.hbm %s0, %s17
      %s19 = sshll.u32 [#allocation3], 4
      %s20 = int_to_ptr.vmem [resolvable:$true] %s19
      %25 = dma.hbm_to_vmem [thread:$0]  %s18, 256, %s20, [#allocation4], 128, 128, 8
    $region5: #{tpu_custom_call.1} parent=1 // pred_fallthru
      _
    // Predicated region
    $region6: #{tpu_custom_call.1} parent=1 // pred_check
      _
    $region7: #{tpu_custom_call.1} parent=1 // pred_check_branch
      %27 = sbr.rel (0) target = $region9
    $region8: #{tpu_custom_call.1} parent=1 // pred_region
      %s28 = sadd.s32 0, 0
      %s29 = smul.u32 2, %s28
      %s31 = ssub.s32 256, 256
      %32 = vsyncadd [#allocation7], %s31
      %s33 = smul.addr %s29, 128
      %s34 = scalar_lea.hbm %s1, %s33
      %s35 = sshll.u32 [#allocation6], 4
      %s36 = int_to_ptr.vmem [resolvable:$true] %s35
      %41 = dma.hbm_to_vmem [thread:$0]  %s34, 256, %s36, [#allocation7], 128, 128, 8
    $region9: #{tpu_custom_call.1} parent=1 // pred_fallthru
      _
    // Predicated region
    $region10: #{tpu_custom_call.1} parent=1 // pred_check
      _
    $region11: #{tpu_custom_call.1} parent=1 // pred_check_branch
      %43 = sbr.rel (0) target = $region13
    $region12: #{tpu_custom_call.1} parent=1 // pred_region
      %44 = dma.done [#allocation4], 256
    $region13: #{tpu_custom_call.1} parent=1 // pred_fallthru
      _
    // Predicated region
    $region14: #{tpu_custom_call.1} parent=1 // pred_check
      _
    $region15: #{tpu_custom_call.1} parent=1 // pred_check_branch
      %46 = sbr.rel (0) target = $region17
    $region16: #{tpu_custom_call.1} parent=1 // pred_region
      %47 = dma.done [#allocation7], 256
    $region17: #{tpu_custom_call.1} parent=1 // pred_fallthru
      _
    %s48 = sadd.s32 0, 0
    %s49 = smul.u32 2, %s48
    %s50 = sadd.s32 0, 0
    %s51 = smul.u32 2, %s50
    %p52 = scmp.eq.s32.totalorder 0, 0
    // Predicated region
    $region18: #{tpu_custom_call.1} parent=1 // pred_check
      %p53 = pneg %p52
    $region19: #{tpu_custom_call.1} parent=1 // pred_check_branch
      %55 = sbr.rel (%p53) target = $region21
    $region20: #{tpu_custom_call.1} parent=1 // pred_region
      %56 = vst [vmem:[#allocation2] sm:$0xff] 0.0
    $region21: #{tpu_custom_call.1} parent=1 // pred_fallthru
      _
    %v57 = vld [vmem:[#allocation3] sm:$0xff]
    %v58 = vld [vmem:[#allocation3 + $0x8] sm:$0xff]
    %v59 = vld [vmem:[#allocation6] sm:$0xff]
    %v60 = vld [vmem:[#allocation6 + $0x8] sm:$0xff]
    %v61 = vsub.f32 %v57, %v59
    %v62 = vsub.f32 %v58, %v60
    %v63 = vmul.f32 %v61, %v61
    %v64 = vmul.f32 %v62, %v62
    %v65 = vadd.f32 %v63, 1e-12
    %v66 = vadd.f32 %v64, 1e-12
    %v67 = vrsqrt.pop %v65
    %v68 = vmul.f32 %v65, %v67
    %vm69 = vcmp.eq.f32.partialorder %v65, inf
    %v70 = vsel %vm69, %v65, %v68
    %vm71 = vcmp.eq.f32.partialorder %v65, 0.0
    %v72 = vand.u32 %v65, 2147483648
    %v73 = vsel %vm71, %v72, %v70
    %v74 = vrsqrt.pop %v66
    %v75 = vmul.f32 %v66, %v74
    %vm76 = vcmp.eq.f32.partialorder %v66, inf
    %v77 = vsel %vm76, %v66, %v75
    %vm78 = vcmp.eq.f32.partialorder %v66, 0.0
    %v79 = vand.u32 %v66, 2147483648
    %v80 = vsel %vm78, %v79, %v77
    %v81 = vld [vmem:[#allocation2] sm:$0xff]
    %v82 = vadd.f32 %v73, %v80
    %v83 = vadd.f32 %v81, %v82
    %84 = vst [vmem:[#allocation2] sm:$0xff] %v83
    // Predicated region
    $region22: #{tpu_custom_call.1} parent=1 // pred_check
      %p85 = pneg %p52
    $region23: #{tpu_custom_call.1} parent=1 // pred_check_branch
      %87 = sbr.rel (%p85) target = $region25
    $region24: #{tpu_custom_call.1} parent=1 // pred_region
      %v88 = vld [vmem:[#allocation2] sm:$0xff]
      %89 = vst [vmem:[#allocation8] sm:$0xff] %v88
    $region25: #{tpu_custom_call.1} parent=1 // pred_fallthru
      _
    // Predicated region
    $region26: #{tpu_custom_call.1} parent=1 // pred_check
      _
    $region27: #{tpu_custom_call.1} parent=1 // pred_check_branch
      %91 = sbr.rel (0) target = $region29
    $region28: #{tpu_custom_call.1} parent=1 // pred_region
      %s93 = ssub.s32 128, 128
      %94 = vsyncadd [#allocation5], %s93
      %s96 = sshll.u32 [#allocation8], 4
      %s97 = int_to_ptr.vmem [resolvable:$true] %s96
      %99 = dma.vmem_to_hbm [thread:$0]  %s97, 128, %s2, [#allocation5]
    $region29: #{tpu_custom_call.1} parent=1 // pred_fallthru
      _
    // Predicated region
    $region30: #{tpu_custom_call.1} parent=1 // pred_check
      _
    $region31: #{tpu_custom_call.1} parent=1 // pred_check_branch
      %101 = sbr.rel (0) target = $region33
    $region32: #{tpu_custom_call.1} parent=1 // pred_region
      %102 = dma.done [#allocation5], 128
    $region33: #{tpu_custom_call.1} parent=1 // pred_fallthru
      _
    %103 = vsyncpa [#allocation4], 1
    %104 = vsyncpa [#allocation7], 1
    %105 = vsyncpa [#allocation5], 1

</llo_original>
